<compile_context>
chip_gen: v6e
topology: v6e:2x2x1
jax: 0.10.0
libtpu: 0.0.40
codegen_flags: <defaults>
</compile_context>

<pallas_src>
import jax
import jax.numpy as jnp
from jax.experimental import pallas as pl
from jax.experimental.pallas import tpu as pltpu


def _embed_kernel(x_ref, tbl_ref, out_ref):
    """One tile of B*S rows, all F fields fused.

    x_ref  : (TM, F)        int32   flattened (b, s) rows of field indices
    tbl_ref: (F, V_pad, D)  float32 stacked padded tables (row 0 zeroed)
    out_ref: (TM, F*D)      float32 concatenated embeddings (lane-dense)
    """
    tm, num_fields = x_ref.shape
    _, v_pad, _d = tbl_ref.shape

    xb = x_ref[...]                                               # (TM, F)
    cols = jax.lax.broadcasted_iota(jnp.int32, (tm, v_pad), 1)    # (TM, V_pad)

    pieces = []
    for f in range(num_fields):                                   # static unroll, F is small
        idx = xb[:, f:f + 1]                                      # (TM, 1) column -> lane bcast
        onehot = (cols == idx).astype(tbl_ref.dtype)              # (TM, V_pad)
        # Embedding lookup == one-hot @ table on the MXU.  padding_idx=0 and
        # any padded/out-of-range rows select the zeroed row 0 -> zeros.
        pieces.append(jnp.dot(onehot, tbl_ref[f],
                              preferred_element_type=jnp.float32))

    # Single full-width (F*D lanes) store of the already-concatenated block.
    out_ref[...] = jnp.concatenate(pieces, axis=-1).astype(out_ref.dtype)


def _round_up(x, m):
    return -(-x // m) * m


def feature_embedding(x, tables):
    """x: [B, S, F] integer indices; tables: [F, V_pad, D] float32.

    Returns [B, S, F*D] float32 == torch.cat([emb_f(x[:, :, f]) for f], dim=-1).
    """
    B, S, F = x.shape
    F2, Vp, D = tables.shape
    assert F == F2

    bs = B * S
    # Row-tile size: multiples of 128 when there is enough work (keeps MXU
    # passes full and gives the megacore scheduler evenly sized parallel
    # blocks); otherwise a single sublane-aligned tile.
    if bs >= 512:
        tm = 512
    elif bs >= 128:
        tm = 128
    else:
        tm = _round_up(bs, 8)
    bs_pad = _round_up(bs, tm)

    x2d = x.reshape(bs, F).astype(jnp.int32)
    if bs_pad != bs:
        # Padded rows index 0 -> zero row of every table; sliced off below.
        x2d = jnp.pad(x2d, ((0, bs_pad - bs), (0, 0)))

    # Explicit VMEM budget: (conservatively double-buffered) table + index
    # tile + output tile.  v7x scoped VMEM is half of v5e/v6e, so make the
    # requirement explicit instead of relying on the default limit.
    need = 2 * (F * Vp * D * 4 + tm * F * 4 + tm * F * D * 4)
    vmem_limit = int(min(64 * 1024 * 1024, max(16 * 1024 * 1024, 2 * need)))

    out = pl.pallas_call(
        _embed_kernel,
        out_shape=jax.ShapeDtypeStruct((bs_pad, F * D), jnp.float32),
        grid=(bs_pad // tm,),
        in_specs=[
            pl.BlockSpec((tm, F), lambda m: (m, 0)),
            # Constant block index -> stacked tables stay VMEM-resident
            # across grid steps (no re-fetch per tile).
            pl.BlockSpec((F, Vp, D), lambda m: (0, 0, 0)),
        ],
        out_specs=pl.BlockSpec((tm, F * D), lambda m: (m, 0)),
        compiler_params=pltpu.CompilerParams(
            dimension_semantics=("parallel",),
            vmem_limit_bytes=vmem_limit),
    )(x2d, tables)

    # Kernel already emits the concatenated [B*S, F*D] layout; reshaping the
    # leading dim is metadata-only (no extra HBM pass / transpose).
    return out[:bs].reshape(B, S, F * D)


def make_tables(key, field_dims, embedding_dim):
    """nn.Embedding-style init (N(0,1)), padding_idx=0 row zeroed, all
    vocabularies padded to a common V_pad (multiple of 128 for lane/sublane
    alignment of the one-hot contraction).  For widely varying real-world
    field_dims, pack tables with per-field offsets (or switch to the gather
    path) to avoid paying the largest field's bytes for every field."""
    v_pad = max(128, _round_up(max(field_dims), 128))
    tables = []
    for i, dim in enumerate(field_dims):
        k = jax.random.fold_in(key, i)
        w = jax.random.normal(k, (dim, embedding_dim), dtype=jnp.float32)
        w = w.at[0].set(0.0)                                       # padding_idx=0
        w = jnp.pad(w, ((0, v_pad - dim), (0, 0)))
        tables.append(w)
    return jnp.stack(tables, axis=0)                               # [F, V_pad, D]


if __name__ == "__main__":
    key = jax.random.PRNGKey(0)

    # Small shapes consistent with the module's forward.
    B, S = 2, 8
    field_dims = [7, 11, 13]
    D = 32
    F = len(field_dims)

    tables = make_tables(key, field_dims, D)

    # Random valid indices per field (0 .. dim-1), includes padding zeros.
    idx_keys = jax.random.split(jax.random.fold_in(key, 1234), F)
    cols = [jax.random.randint(idx_keys[i], (B, S), 0, field_dims[i], dtype=jnp.int32)
            for i in range(F)]
    x = jnp.stack(cols, axis=-1)                                   # [B, S, F]

    out = feature_embedding(x, tables)
    jax.block_until_ready(out)

    # Pure-JAX reference: gather + concat along last dim.
    ref = jnp.concatenate(
        [jnp.take(tables[i], x[:, :, i], axis=0) for i in range(F)], axis=-1)
    assert out.shape == (B, S, F * D)
    assert jnp.allclose(out, ref, atol=1e-5), "mismatch vs reference"

    print("KERNEL_OK")
</pallas_src>

<mosaic_0001>
module attributes {stable_mosaic.version = 11 : i64} {
  func.func @_embed_kernel(%arg0: i32, %arg1: memref<16x3xi32, #tpu.memory_space<vmem>>, %arg2: memref<3x128x32xf32, #tpu.memory_space<vmem>>, %arg3: memref<16x96xf32, #tpu.memory_space<vmem>>) attributes {dimension_semantics = [#tpu.dimension_semantics<parallel>], iteration_bounds = array<i64: 1>, scalar_prefetch = 0 : i64, scratch_operands = 0 : i64, tpu.core_type = #tpu.core_type<tc>, window_params = [{transform_indices = @transform_0, window_bounds = array<i64: 16, 3>}, {pipeline_mode = #tpu.pipeline_mode<synchronous>, transform_indices = @transform_1, window_bounds = array<i64: 3, 128, 32>}, {transform_indices = @transform_2, window_bounds = array<i64: 16, 96>}]} {
    %c0 = arith.constant 0 : index
    %c0_0 = arith.constant 0 : index
    %0 = vector.load %arg1[%c0, %c0_0] : memref<16x3xi32, #tpu.memory_space<vmem>>, vector<16x3xi32>
    %1 = tpu.iota {dimensions = array<i32: 1>} : vector<16x128xi32>
    %2 = vector.extract_strided_slice %0 {offsets = [0, 0], sizes = [16, 1], strides = [1, 1]} : vector<16x3xi32> to vector<16x1xi32>
    %3 = vector.broadcast %2 : vector<16x1xi32> to vector<16x128xi32>
    %4 = arith.cmpi eq, %1, %3 : vector<16x128xi32>
    %5 = arith.extui %4 : vector<16x128xi1> to vector<16x128xi32>
    %6 = arith.sitofp %5 : vector<16x128xi32> to vector<16x128xf32>
    %c0_1 = arith.constant 0 : index
    %c0_2 = arith.constant 0 : index
    %c0_3 = arith.constant 0 : index
    %7 = vector.load %arg2[%c0_1, %c0_2, %c0_3] : memref<3x128x32xf32, #tpu.memory_space<vmem>>, vector<1x128x32xf32>
    %8 = vector.shape_cast %7 : vector<1x128x32xf32> to vector<128x32xf32>
    %cst = arith.constant dense<0.000000e+00> : vector<16x32xf32>
    %9 = tpu.matmul %6, %8, %cst {dimension_numbers = #tpu.dot_dimension_numbers<[1], [0], [0], [1], [0, 0, 1, 1], [], []>} : vector<16x128xf32>, vector<128x32xf32>, vector<16x32xf32> -> vector<16x32xf32>
    %10 = vector.extract_strided_slice %0 {offsets = [0, 1], sizes = [16, 1], strides = [1, 1]} : vector<16x3xi32> to vector<16x1xi32>
    %11 = vector.broadcast %10 : vector<16x1xi32> to vector<16x128xi32>
    %12 = arith.cmpi eq, %1, %11 : vector<16x128xi32>
    %13 = arith.extui %12 : vector<16x128xi1> to vector<16x128xi32>
    %14 = arith.sitofp %13 : vector<16x128xi32> to vector<16x128xf32>
    %c1 = arith.constant 1 : index
    %c0_4 = arith.constant 0 : index
    %c0_5 = arith.constant 0 : index
    %15 = vector.load %arg2[%c1, %c0_4, %c0_5] : memref<3x128x32xf32, #tpu.memory_space<vmem>>, vector<1x128x32xf32>
    %16 = vector.shape_cast %15 : vector<1x128x32xf32> to vector<128x32xf32>
    %cst_6 = arith.constant dense<0.000000e+00> : vector<16x32xf32>
    %17 = tpu.matmul %14, %16, %cst_6 {dimension_numbers = #tpu.dot_dimension_numbers<[1], [0], [0], [1], [0, 0, 1, 1], [], []>} : vector<16x128xf32>, vector<128x32xf32>, vector<16x32xf32> -> vector<16x32xf32>
    %18 = vector.extract_strided_slice %0 {offsets = [0, 2], sizes = [16, 1], strides = [1, 1]} : vector<16x3xi32> to vector<16x1xi32>
    %19 = vector.broadcast %18 : vector<16x1xi32> to vector<16x128xi32>
    %20 = arith.cmpi eq, %1, %19 : vector<16x128xi32>
    %21 = arith.extui %20 : vector<16x128xi1> to vector<16x128xi32>
    %22 = arith.sitofp %21 : vector<16x128xi32> to vector<16x128xf32>
    %c2 = arith.constant 2 : index
    %c0_7 = arith.constant 0 : index
    %c0_8 = arith.constant 0 : index
    %23 = vector.load %arg2[%c2, %c0_7, %c0_8] : memref<3x128x32xf32, #tpu.memory_space<vmem>>, vector<1x128x32xf32>
    %24 = vector.shape_cast %23 : vector<1x128x32xf32> to vector<128x32xf32>
    %cst_9 = arith.constant dense<0.000000e+00> : vector<16x32xf32>
    %25 = tpu.matmul %22, %24, %cst_9 {dimension_numbers = #tpu.dot_dimension_numbers<[1], [0], [0], [1], [0, 0, 1, 1], [], []>} : vector<16x128xf32>, vector<128x32xf32>, vector<16x32xf32> -> vector<16x32xf32>
    %26 = tpu.concatenate %9, %17, %25 in 1 : vector<16x32xf32>, vector<16x32xf32>, vector<16x32xf32> -> vector<16x96xf32>
    %c0_10 = arith.constant 0 : index
    %c0_11 = arith.constant 0 : index
    %27 = vector.load %arg3[%c0_10, %c0_11] : memref<16x96xf32, #tpu.memory_space<vmem>>, vector<16x96xf32>
    tpu.vector_store %arg3[%c0_10, %c0_11], %26 {strides = array<i32>} : memref<16x96xf32, #tpu.memory_space<vmem>>, vector<16x96xf32>,
    return
  }
  func.func @transform_0(%arg0: i32) -> (i32, i32) {
    %c0_i32 = arith.constant 0 : i32
    %c0_i32_0 = arith.constant 0 : i32
    return %arg0, %c0_i32 : i32, i32
  }
  func.func @transform_1(%arg0: i32) -> (i32, i32, i32) {
    %c0_i32 = arith.constant 0 : i32
    %c0_i32_0 = arith.constant 0 : i32
    %c0_i32_1 = arith.constant 0 : i32
    %c0_i32_2 = arith.constant 0 : i32
    return %c0_i32, %c0_i32_0, %c0_i32_1 : i32, i32, i32
  }
  func.func @transform_2(%arg0: i32) -> (i32, i32) {
    %c0_i32 = arith.constant 0 : i32
    %c0_i32_0 = arith.constant 0 : i32
    return %arg0, %c0_i32 : i32, i32
  }
}

</mosaic_0001>

<llo_original>
// kernel: tpu_custom_call.1
$region0: #{tpu_custom_call.1}
  #allocation0 [shape = 'u32[]', space=smem, size = 0x4, offset = 0x4, fixed_abs, tag = 'smem constant byte address 0x4 - core index']
  #allocation1 [shape = 'u32[144,128]{1,0:T(1,128)}', space=vmem, size = 0x12000, scoped, tag = 'internal scratch']
  %s0 = inlined_call_operand.vmem [shape: s32[16,3], index: 0, kind: input, shape index: {}]
  %s1 = inlined_call_operand.vmem [shape: f32[3,128,32], index: 1, kind: input, shape index: {}]
  %s2 = inlined_call_operand.hbm [shape: f32[16,96], index: 2, kind: output, shape index: {}]
  %s3 = sld [smem:[#allocation0]]
  $region18: #{tpu_custom_call.1} parent=0
    _
  %s5 = ssub.s32 1, %s3
  %s6 = scalar_select 0, %s5, %s3
  $region1: #{tpu_custom_call.1} parent=0
    #allocation2 [shape = 'u8[8192]{0}', space=vmem, size = 0x2000, scoped, tag = 'output window, operand 0, single buffered']
    #allocation3 [shape = 's32[1]{0}', space=sflag, size = 0x4, scoped, tag = 'scoped memory for tpu_custom_call.1']
    %7 = vsyncpa [#allocation3], 0
    // Predicated region
    $region2: #{tpu_custom_call.1} parent=1 // pred_check
      _
    $region3: #{tpu_custom_call.1} parent=1 // pred_check_branch
      %9 = sbr.rel (0) target = $region5
    $region4: #{tpu_custom_call.1} parent=1 // pred_region
      _
    $region5: #{tpu_custom_call.1} parent=1 // pred_fallthru
      _
    // Predicated region
    $region6: #{tpu_custom_call.1} parent=1 // pred_check
      _
    $region7: #{tpu_custom_call.1} parent=1 // pred_check_branch
      %11 = sbr.rel (0) target = $region9
    $region8: #{tpu_custom_call.1} parent=1 // pred_region
      _
    $region9: #{tpu_custom_call.1} parent=1 // pred_fallthru
      _
    %v12 = vld [vmem:[%s0] sm:$0xff]
    %v13 = vld [vmem:[%s0 + $0x8] sm:$0xff]
    %v14 = vlaneseq
    %v15 = vand.u32 %v14, 127
    %16 = vset.pattern.permute.xlu0 0
    %17 = vperm.xlu0 %16, %v12
    %v18 = vpop.permute.xlu0 %17
    %19 = vset.pattern.permute.xlu0 0
    %20 = vperm.xlu0 %19, %v13
    %v21 = vpop.permute.xlu0 %20
    %vm22 = vcmp.eq.s32.totalorder %v15, %v18
    %vm23 = vcmp.eq.s32.totalorder %v15, %v21
    %v24 = vsel %vm22, 1, 0
    %v25 = vsel %vm23, 1, 0
    %v26 = vcvt.s32.f32 %v24
    %v27 = vcvt.s32.f32 %v25
    %v28 = vld [vmem:[%s1] sm:$0xff]
    %v29 = vld [vmem:[%s1 + $0x8] sm:$0xff]
    %v30 = vld [vmem:[%s1 + $0x10] sm:$0xff]
    %v31 = vld [vmem:[%s1 + $0x18] sm:$0xff]
    %v32 = vld [vmem:[%s1 + $0x20] sm:$0xff]
    %v33 = vld [vmem:[%s1 + $0x28] sm:$0xff]
    %v34 = vld [vmem:[%s1 + $0x30] sm:$0xff]
    %v35 = vld [vmem:[%s1 + $0x38] sm:$0xff]
    %v36 = vld [vmem:[%s1 + $0x40] sm:$0xff]
    %v37 = vld [vmem:[%s1 + $0x48] sm:$0xff]
    %v38 = vld [vmem:[%s1 + $0x50] sm:$0xff]
    %v39 = vld [vmem:[%s1 + $0x58] sm:$0xff]
    %v40 = vld [vmem:[%s1 + $0x60] sm:$0xff]
    %v41 = vld [vmem:[%s1 + $0x68] sm:$0xff]
    %v42 = vld [vmem:[%s1 + $0x70] sm:$0xff]
    %v43 = vld [vmem:[%s1 + $0x78] sm:$0xff]
    %44 = vmatprep.subr.mxu0 0.0
    %45 = vmatpush1.msra.mxu0 %v43
    %46 = vmatprep.subr.mxu0 0.0
    %47 = vmatpush1.msra.mxu0 %v42
    %48 = vmatprep.subr.mxu0 0.0
    %49 = vmatpush1.msra.mxu0 %v41
    %50 = vmatprep.subr.mxu0 0.0
    %51 = vmatpush1.msra.mxu0 %v40
    %52 = vmatprep.subr.mxu0 0.0
    %53 = vmatpush1.msra.mxu0 %v39
    %54 = vmatprep.subr.mxu0 0.0
    %55 = vmatpush1.msra.mxu0 %v38
    %56 = vmatprep.subr.mxu0 0.0
    %57 = vmatpush1.msra.mxu0 %v37
    %58 = vmatprep.subr.mxu0 0.0
    %59 = vmatpush1.msra.mxu0 %v36
    %60 = vmatprep.subr.mxu0 0.0
    %61 = vmatpush1.msra.mxu0 %v35
    %62 = vmatprep.subr.mxu0 0.0
    %63 = vmatpush1.msra.mxu0 %v34
    %64 = vmatprep.subr.mxu0 0.0
    %65 = vmatpush1.msra.mxu0 %v33
    %66 = vmatprep.subr.mxu0 0.0
    %67 = vmatpush1.msra.mxu0 %v32
    %68 = vmatprep.subr.mxu0 0.0
    %69 = vmatpush1.msra.mxu0 %v31
    %70 = vmatprep.subr.mxu0 0.0
    %71 = vmatpush1.msra.mxu0 %v30
    %72 = vmatprep.subr.mxu0 0.0
    %73 = vmatpush1.msra.mxu0 %v29
    %74 = vmatprep.subr.mxu0 0.0
    %75 = vmatpush1.msra.mxu0 %v28
    %76 = vmatprep.subr.mxu0 0.0
    %77 = vmatpush2.msra.mxu0 0.0
    %78 = vmatprep.subr.mxu0 0.0
    %79 = vmatpush2.msra.mxu0 0.0
    %80 = vmatprep.subr.mxu0 0.0
    %81 = vmatpush2.msra.mxu0 0.0
    %82 = vmatprep.subr.mxu0 0.0
    %83 = vmatpush2.msra.mxu0 0.0
    %84 = vmatprep.subr.mxu0 0.0
    %85 = vmatpush2.msra.mxu0 0.0
    %86 = vmatprep.subr.mxu0 0.0
    %87 = vmatpush2.msra.mxu0 0.0
    %88 = vmatprep.subr.mxu0 0.0
    %89 = vmatpush2.msra.mxu0 0.0
    %90 = vmatprep.subr.mxu0 0.0
    %91 = vmatpush2.msra.mxu0 0.0
    %92 = vmatprep.subr.mxu0 0.0
    %93 = vmatpush2.msra.mxu0 0.0
    %94 = vmatprep.subr.mxu0 0.0
    %95 = vmatpush2.msra.mxu0 0.0
    %96 = vmatprep.subr.mxu0 0.0
    %97 = vmatpush2.msra.mxu0 0.0
    %98 = vmatprep.subr.mxu0 0.0
    %99 = vmatpush2.msra.mxu0 0.0
    %100 = vmatprep.subr.mxu0 0.0
    %101 = vmatpush2.msra.mxu0 0.0
    %102 = vmatprep.subr.mxu0 0.0
    %103 = vmatpush2.msra.mxu0 0.0
    %104 = vmatprep.subr.mxu0 0.0
    %105 = vmatpush2.msra.mxu0 0.0
    %106 = vmatprep.subr.mxu0 0.0
    %107 = vmatpush2.msra.mxu0 0.0
    %108 = vmatprep.mubr.f32.mxu0 0.0
    %109 = vmatmul.mubr.f32.gmra.mxu0 %v26
    %v110 = vpop.f32.mrf.mxu0
    %v111 = vadd.f32 0.0, %v110
    %v112 = vpop.f32.mrf.mxu0
    %113 = vmatprep.mubr.f32.mxu0 0.0
    %114 = vmatmul.mubr.f32.gmra.mxu0 %v27
    %v115 = vpop.f32.mrf.mxu0
    %v116 = vadd.f32 0.0, %v115
    %v117 = vpop.f32.mrf.mxu0
    %118 = vdwg.mxu0
    %119 = vset.pattern.permute.xlu0 1
    %120 = vperm.xlu0 %119, %v12
    %v121 = vpop.permute.xlu0 %120
    %122 = vset.pattern.permute.xlu0 1
    %123 = vperm.xlu0 %122, %v13
    %v124 = vpop.permute.xlu0 %123
    %vm125 = vcmp.eq.s32.totalorder %v15, %v121
    %vm126 = vcmp.eq.s32.totalorder %v15, %v124
    %v127 = vsel %vm125, 1, 0
    %v128 = vsel %vm126, 1, 0
    %v129 = vcvt.s32.f32 %v127
    %v130 = vcvt.s32.f32 %v128
    %s131 = scalar_lea.vmem %s1, 128
    %v132 = vld [vmem:[%s131] sm:$0xff]
    %v133 = vld [vmem:[%s131 + $0x8] sm:$0xff]
    %v134 = vld [vmem:[%s131 + $0x10] sm:$0xff]
    %v135 = vld [vmem:[%s131 + $0x18] sm:$0xff]
    %v136 = vld [vmem:[%s131 + $0x20] sm:$0xff]
    %v137 = vld [vmem:[%s131 + $0x28] sm:$0xff]
    %v138 = vld [vmem:[%s131 + $0x30] sm:$0xff]
    %v139 = vld [vmem:[%s131 + $0x38] sm:$0xff]
    %v140 = vld [vmem:[%s131 + $0x40] sm:$0xff]
    %v141 = vld [vmem:[%s131 + $0x48] sm:$0xff]
    %v142 = vld [vmem:[%s131 + $0x50] sm:$0xff]
    %v143 = vld [vmem:[%s131 + $0x58] sm:$0xff]
    %v144 = vld [vmem:[%s131 + $0x60] sm:$0xff]
    %v145 = vld [vmem:[%s131 + $0x68] sm:$0xff]
    %v146 = vld [vmem:[%s131 + $0x70] sm:$0xff]
    %v147 = vld [vmem:[%s131 + $0x78] sm:$0xff]
    %148 = vmatprep.subr.mxu0 0.0
    %149 = vmatpush1.msra.mxu0 %v147
    %150 = vmatprep.subr.mxu0 0.0
    %151 = vmatpush1.msra.mxu0 %v146
    %152 = vmatprep.subr.mxu0 0.0
    %153 = vmatpush1.msra.mxu0 %v145
    %154 = vmatprep.subr.mxu0 0.0
    %155 = vmatpush1.msra.mxu0 %v144
    %156 = vmatprep.subr.mxu0 0.0
    %157 = vmatpush1.msra.mxu0 %v143
    %158 = vmatprep.subr.mxu0 0.0
    %159 = vmatpush1.msra.mxu0 %v142
    %160 = vmatprep.subr.mxu0 0.0
    %161 = vmatpush1.msra.mxu0 %v141
    %162 = vmatprep.subr.mxu0 0.0
    %163 = vmatpush1.msra.mxu0 %v140
    %164 = vmatprep.subr.mxu0 0.0
    %165 = vmatpush1.msra.mxu0 %v139
    %166 = vmatprep.subr.mxu0 0.0
    %167 = vmatpush1.msra.mxu0 %v138
    %168 = vmatprep.subr.mxu0 0.0
    %169 = vmatpush1.msra.mxu0 %v137
    %170 = vmatprep.subr.mxu0 0.0
    %171 = vmatpush1.msra.mxu0 %v136
    %172 = vmatprep.subr.mxu0 0.0
    %173 = vmatpush1.msra.mxu0 %v135
    %174 = vmatprep.subr.mxu0 0.0
    %175 = vmatpush1.msra.mxu0 %v134
    %176 = vmatprep.subr.mxu0 0.0
    %177 = vmatpush1.msra.mxu0 %v133
    %178 = vmatprep.subr.mxu0 0.0
    %179 = vmatpush1.msra.mxu0 %v132
    %180 = vmatprep.subr.mxu0 0.0
    %181 = vmatpush2.msra.mxu0 0.0
    %182 = vmatprep.subr.mxu0 0.0
    %183 = vmatpush2.msra.mxu0 0.0
    %184 = vmatprep.subr.mxu0 0.0
    %185 = vmatpush2.msra.mxu0 0.0
    %186 = vmatprep.subr.mxu0 0.0
    %187 = vmatpush2.msra.mxu0 0.0
    %188 = vmatprep.subr.mxu0 0.0
    %189 = vmatpush2.msra.mxu0 0.0
    %190 = vmatprep.subr.mxu0 0.0
    %191 = vmatpush2.msra.mxu0 0.0
    %192 = vmatprep.subr.mxu0 0.0
    %193 = vmatpush2.msra.mxu0 0.0
    %194 = vmatprep.subr.mxu0 0.0
    %195 = vmatpush2.msra.mxu0 0.0
    %196 = vmatprep.subr.mxu0 0.0
    %197 = vmatpush2.msra.mxu0 0.0
    %198 = vmatprep.subr.mxu0 0.0
    %199 = vmatpush2.msra.mxu0 0.0
    %200 = vmatprep.subr.mxu0 0.0
    %201 = vmatpush2.msra.mxu0 0.0
    %202 = vmatprep.subr.mxu0 0.0
    %203 = vmatpush2.msra.mxu0 0.0
    %204 = vmatprep.subr.mxu0 0.0
    %205 = vmatpush2.msra.mxu0 0.0
    %206 = vmatprep.subr.mxu0 0.0
    %207 = vmatpush2.msra.mxu0 0.0
    %208 = vmatprep.subr.mxu0 0.0
    %209 = vmatpush2.msra.mxu0 0.0
    %210 = vmatprep.subr.mxu0 0.0
    %211 = vmatpush2.msra.mxu0 0.0
    %212 = vmatprep.mubr.f32.mxu0 0.0
    %213 = vmatmul.mubr.f32.gmra.mxu0 %v129
    %v214 = vpop.f32.mrf.mxu0
    %v215 = vadd.f32 0.0, %v214
    %v216 = vpop.f32.mrf.mxu0
    %217 = vmatprep.mubr.f32.mxu0 0.0
    %218 = vmatmul.mubr.f32.gmra.mxu0 %v130
    %v219 = vpop.f32.mrf.mxu0
    %v220 = vadd.f32 0.0, %v219
    %v221 = vpop.f32.mrf.mxu0
    %222 = vdwg.mxu0
    %223 = vset.pattern.permute.xlu0 2
    %224 = vperm.xlu0 %223, %v12
    %v225 = vpop.permute.xlu0 %224
    %226 = vset.pattern.permute.xlu0 2
    %227 = vperm.xlu0 %226, %v13
    %v228 = vpop.permute.xlu0 %227
    %vm229 = vcmp.eq.s32.totalorder %v15, %v225
    %vm230 = vcmp.eq.s32.totalorder %v15, %v228
    %v231 = vsel %vm229, 1, 0
    %v232 = vsel %vm230, 1, 0
    %v233 = vcvt.s32.f32 %v231
    %v234 = vcvt.s32.f32 %v232
    %s235 = scalar_lea.vmem %s1, 256
    %v236 = vld [vmem:[%s235] sm:$0xff]
    %v237 = vld [vmem:[%s235 + $0x8] sm:$0xff]
    %v238 = vld [vmem:[%s235 + $0x10] sm:$0xff]
    %v239 = vld [vmem:[%s235 + $0x18] sm:$0xff]
    %v240 = vld [vmem:[%s235 + $0x20] sm:$0xff]
    %v241 = vld [vmem:[%s235 + $0x28] sm:$0xff]
    %v242 = vld [vmem:[%s235 + $0x30] sm:$0xff]
    %v243 = vld [vmem:[%s235 + $0x38] sm:$0xff]
    %v244 = vld [vmem:[%s235 + $0x40] sm:$0xff]
    %v245 = vld [vmem:[%s235 + $0x48] sm:$0xff]
    %v246 = vld [vmem:[%s235 + $0x50] sm:$0xff]
    %v247 = vld [vmem:[%s235 + $0x58] sm:$0xff]
    %v248 = vld [vmem:[%s235 + $0x60] sm:$0xff]
    %v249 = vld [vmem:[%s235 + $0x68] sm:$0xff]
    %v250 = vld [vmem:[%s235 + $0x70] sm:$0xff]
    %v251 = vld [vmem:[%s235 + $0x78] sm:$0xff]
    %252 = vmatprep.subr.mxu0 0.0
    %253 = vmatpush1.msra.mxu0 %v251
    %254 = vmatprep.subr.mxu0 0.0
    %255 = vmatpush1.msra.mxu0 %v250
    %256 = vmatprep.subr.mxu0 0.0
    %257 = vmatpush1.msra.mxu0 %v249
    %258 = vmatprep.subr.mxu0 0.0
    %259 = vmatpush1.msra.mxu0 %v248
    %260 = vmatprep.subr.mxu0 0.0
    %261 = vmatpush1.msra.mxu0 %v247
    %262 = vmatprep.subr.mxu0 0.0
    %263 = vmatpush1.msra.mxu0 %v246
    %264 = vmatprep.subr.mxu0 0.0
    %265 = vmatpush1.msra.mxu0 %v245
    %266 = vmatprep.subr.mxu0 0.0
    %267 = vmatpush1.msra.mxu0 %v244
    %268 = vmatprep.subr.mxu0 0.0
    %269 = vmatpush1.msra.mxu0 %v243
    %270 = vmatprep.subr.mxu0 0.0
    %271 = vmatpush1.msra.mxu0 %v242
    %272 = vmatprep.subr.mxu0 0.0
    %273 = vmatpush1.msra.mxu0 %v241
    %274 = vmatprep.subr.mxu0 0.0
    %275 = vmatpush1.msra.mxu0 %v240
    %276 = vmatprep.subr.mxu0 0.0
    %277 = vmatpush1.msra.mxu0 %v239
    %278 = vmatprep.subr.mxu0 0.0
    %279 = vmatpush1.msra.mxu0 %v238
    %280 = vmatprep.subr.mxu0 0.0
    %281 = vmatpush1.msra.mxu0 %v237
    %282 = vmatprep.subr.mxu0 0.0
    %283 = vmatpush1.msra.mxu0 %v236
    %284 = vmatprep.subr.mxu0 0.0
    %285 = vmatpush2.msra.mxu0 0.0
    %286 = vmatprep.subr.mxu0 0.0
    %287 = vmatpush2.msra.mxu0 0.0
    %288 = vmatprep.subr.mxu0 0.0
    %289 = vmatpush2.msra.mxu0 0.0
    %290 = vmatprep.subr.mxu0 0.0
    %291 = vmatpush2.msra.mxu0 0.0
    %292 = vmatprep.subr.mxu0 0.0
    %293 = vmatpush2.msra.mxu0 0.0
    %294 = vmatprep.subr.mxu0 0.0
    %295 = vmatpush2.msra.mxu0 0.0
    %296 = vmatprep.subr.mxu0 0.0
    %297 = vmatpush2.msra.mxu0 0.0
    %298 = vmatprep.subr.mxu0 0.0
    %299 = vmatpush2.msra.mxu0 0.0
    %300 = vmatprep.subr.mxu0 0.0
    %301 = vmatpush2.msra.mxu0 0.0
    %302 = vmatprep.subr.mxu0 0.0
    %303 = vmatpush2.msra.mxu0 0.0
    %304 = vmatprep.subr.mxu0 0.0
    %305 = vmatpush2.msra.mxu0 0.0
    %306 = vmatprep.subr.mxu0 0.0
    %307 = vmatpush2.msra.mxu0 0.0
    %308 = vmatprep.subr.mxu0 0.0
    %309 = vmatpush2.msra.mxu0 0.0
    %310 = vmatprep.subr.mxu0 0.0
    %311 = vmatpush2.msra.mxu0 0.0
    %312 = vmatprep.subr.mxu0 0.0
    %313 = vmatpush2.msra.mxu0 0.0
    %314 = vmatprep.subr.mxu0 0.0
    %315 = vmatpush2.msra.mxu0 0.0
    %316 = vmatprep.mubr.f32.mxu0 0.0
    %317 = vmatmul.mubr.f32.gmra.mxu0 %v233
    %v318 = vpop.f32.mrf.mxu0
    %v319 = vadd.f32 0.0, %v318
    %v320 = vpop.f32.mrf.mxu0
    %321 = vmatprep.mubr.f32.mxu0 0.0
    %322 = vmatmul.mubr.f32.gmra.mxu0 %v234
    %v323 = vpop.f32.mrf.mxu0
    %v324 = vadd.f32 0.0, %v323
    %v325 = vpop.f32.mrf.mxu0
    %326 = vdwg.mxu0
    %329 = vrot.lane.b32.xlu0 %v215, 32
    %v330 = vpop.permute.xlu0 %329
    %331 = vrot.lane.b32.xlu0 %v220, 32
    %v332 = vpop.permute.xlu0 %331
    %337 = vrot.lane.b32.xlu0 %v319, 64
    %v338 = vpop.permute.xlu0 %337
    %339 = vrot.lane.b32.xlu0 %v324, 64
    %v340 = vpop.permute.xlu0 %339
    %vm343 = vcmask 261120
    %v344 = vsel %vm343, %v111, %v330
    %v345 = vsel %vm343, %v116, %v332
    %vm346 = vcmask 523264
    %v347 = vsel %vm346, %v344, %v338
    %v348 = vsel %vm346, %v345, %v340
    %vm349 = vcmask 785408
    %350 = vst.msk [vmem:[#allocation2] sm:$0xff] %vm349, %v347
    %351 = vst.msk [vmem:[#allocation2 + $0x8] sm:$0xff] %vm349, %v348
    // Predicated region
    $region10: #{tpu_custom_call.1} parent=1 // pred_check
      _
    $region11: #{tpu_custom_call.1} parent=1 // pred_check_branch
      %353 = sbr.rel (0) target = $region13
    $region12: #{tpu_custom_call.1} parent=1 // pred_region
      %s355 = ssub.s32 256, 256
      %356 = vsyncadd [#allocation3], %s355
      %s357 = sshll.u32 [#allocation2], 4
      %s358 = int_to_ptr.vmem [resolvable:$true] %s357
      %363 = dma.vmem_to_hbm [thread:$0]  %s358, 256, %s2, [#allocation3], 128, 128, 8
    $region13: #{tpu_custom_call.1} parent=1 // pred_fallthru
      _
    // Predicated region
    $region14: #{tpu_custom_call.1} parent=1 // pred_check
      _
    $region15: #{tpu_custom_call.1} parent=1 // pred_check_branch
      %365 = sbr.rel (0) target = $region17
    $region16: #{tpu_custom_call.1} parent=1 // pred_region
      %366 = dma.done [#allocation3], 256
    $region17: #{tpu_custom_call.1} parent=1 // pred_fallthru
      _
    %367 = vsyncpa [#allocation3], 1

</llo_original>
